<compile_context>
chip_gen: v7x
topology: tpu7x:2x2x1
jax: 0.10.0
libtpu: 0.0.40
codegen_flags: <defaults>
</compile_context>

<pallas_src>
import functools

import jax
import jax.numpy as jnp
from jax.experimental import pallas as pl
from jax.experimental.pallas import tpu as pltpu

_EPS = 1e-8
_NCORES = 2  # leading "parallel" grid axis; sharded across TCs on v7x, looped elsewhere


def _cosine_loss_kernel(s_ref, t_ref, o_ref, acc_ref, *, total_rows, tiles_per_core):
    """Accumulate sum(cos) over this core's slice; write the per-core partial at the end."""
    c = pl.program_id(0)   # core-split index ("parallel")
    j = pl.program_id(1)   # reduction step inside this core's slice ("arbitrary")

    @pl.when(j == 0)
    def _init():
        acc_ref[...] = jnp.zeros_like(acc_ref)

    # Inputs may be bf16; cast per tile in-kernel and reduce in f32.
    s = s_ref[...].astype(jnp.float32)
    t = t_ref[...].astype(jnp.float32)

    # Lane-axis (XLU) reductions; keep everything (TB, 1) 2-D.
    dot = jnp.sum(s * t, axis=1, keepdims=True)   # (TB, 1)
    ss = jnp.sum(s * s, axis=1, keepdims=True)    # (TB, 1)
    tt = jnp.sum(t * t, axis=1, keepdims=True)    # (TB, 1)

    # sqrt(ss)*sqrt(tt) avoids f32 overflow of ss*tt for huge-norm rows (EUP sqrts).
    denom = jnp.maximum(jnp.sqrt(ss) * jnp.sqrt(tt), _EPS)
    cos = dot / denom

    # Mask rows beyond the true batch. Covers both the ragged last tile and any
    # fully-out-of-range tile created by the 2-way core split (whose DMA index is
    # clamped to the last real block in the index_map).
    tb = cos.shape[0]
    logical_tile = c * tiles_per_core + j
    row = logical_tile * tb + jax.lax.broadcasted_iota(jnp.int32, (tb, 1), 0)
    cos = jnp.where(row < total_rows, cos, 0.0)

    # Elementwise add only; no per-step cross-sublane reduce / scalar RMW.
    acc_ref[...] += cos

    @pl.when(j == pl.num_programs(1) - 1)
    def _finalize():
        partial = jnp.sum(acc_ref[...])           # single XLU reduce per core
        o_ref[...] = jnp.full(o_ref.shape, partial, o_ref.dtype)


def _round_up(x, m):
    return ((x + m - 1) // m) * m


def _vmem_budget():
    """(tile-sizing budget, vmem_limit ceiling) derived from physical VMEM."""
    try:
        phys = int(pltpu.get_tpu_info().vmem_capacity_bytes)
    except Exception:
        phys = 64 << 20  # conservative fallback (v7x size; v5e/v6e have 128 MiB)
    limit_cap = (phys * 3) // 4   # leave headroom for Mosaic internal scratch/sems
    budget = phys // 2            # size the kernel working set against this
    return budget, limit_cap


def cosine_similarity_loss(student, teacher, *, max_tile_rows=None):
    """loss = 1 - mean(cosine_similarity(student, teacher, dim=1)) for (B, D) inputs."""
    assert student.shape == teacher.shape and student.ndim == 2
    B, D = student.shape
    itemsize = jnp.dtype(student.dtype).itemsize
    # Sublane packing: rows-per-tile multiple of 8 (f32) / 16 (bf16).
    row_align = max(8, 32 // itemsize)

    budget, limit_cap = _vmem_budget()
    # Live VMEM per tile row:
    #   2 inputs x 2 pipeline buffers (native dtype)
    #   + up to 5 live (TB, D) f32 temporaries (s, t, and the three products)
    #   + ~6 lane-padded (TB, 1) f32 per-row vectors (dot/ss/tt/cos/mask/accumulator)
    bytes_per_row = 2 * 2 * D * itemsize + 5 * D * 4 + 6 * 128 * 4
    tb = budget // bytes_per_row
    rows_per_core = pl.cdiv(B, _NCORES)
    tb = min(tb, _round_up(rows_per_core, row_align))
    if max_tile_rows is not None:
        tb = min(tb, _round_up(max_tile_rows, row_align))
    tb = max(row_align, (tb // row_align) * row_align)

    num_blocks = pl.cdiv(B, tb)                   # real blocks covering B rows
    tiles_per_core = pl.cdiv(num_blocks, _NCORES)
    last_block = num_blocks - 1

    vmem_need = tb * bytes_per_row + (4 << 20)
    vmem_limit = int(min(limit_cap, max(32 << 20, vmem_need)))

    def in_index(c, j):
        # Clamp so the DMA window of a fully-out-of-range tile (core split overshoot)
        # stays in bounds; its rows are zeroed by the in-kernel mask anyway.
        return (jnp.minimum(c * tiles_per_core + j, last_block), 0)

    kernel = functools.partial(
        _cosine_loss_kernel, total_rows=B, tiles_per_core=tiles_per_core)

    out = pl.pallas_call(
        kernel,
        out_shape=jax.ShapeDtypeStruct((_NCORES, 8, 128), jnp.float32),
        grid_spec=pltpu.PrefetchScalarGridSpec(
            num_scalar_prefetch=0,
            grid=(_NCORES, tiles_per_core),
            in_specs=[
                pl.BlockSpec((tb, D), in_index),
                pl.BlockSpec((tb, D), in_index),
            ],
            out_specs=pl.BlockSpec((1, 8, 128), lambda c, j: (c, 0, 0)),
            scratch_shapes=[pltpu.VMEM((tb, 1), jnp.float32)],
        ),
        compiler_params=pltpu.CompilerParams(
            # Core-split axis independent -> parallel (megacore); batch-stream axis
            # reduces into the per-core accumulator -> arbitrary.
            dimension_semantics=("parallel", "arbitrary"),
            vmem_limit_bytes=vmem_limit,
        ),
    )(student, teacher)

    partials = out[:, 0, 0]                       # (NCORES,) per-core sum of cos
    return (1.0 - jnp.sum(partials) / B).astype(jnp.float32)


def _reference_loss(student, teacher):
    s = student.astype(jnp.float32)
    t = teacher.astype(jnp.float32)
    dot = jnp.sum(s * t, axis=1)
    denom = jnp.maximum(
        jnp.linalg.norm(s, axis=1) * jnp.linalg.norm(t, axis=1), _EPS)
    return 1.0 - jnp.mean(dot / denom)


if __name__ == "__main__":
    key = jax.random.PRNGKey(0)
    k1, k2, k3, k4, k5, k6 = jax.random.split(key, 6)

    # Case 1: lane-aligned f32, single real block (core 1 gets a fully-masked tile).
    s1 = jax.random.normal(k1, (8, 128), dtype=jnp.float32)
    t1 = jax.random.normal(k2, (8, 128), dtype=jnp.float32)
    loss1 = cosine_similarity_loss(s1, t1)
    jax.block_until_ready(loss1)
    assert jnp.allclose(loss1, _reference_loss(s1, t1), atol=1e-5, rtol=1e-5), (
        loss1, _reference_loss(s1, t1))

    # Case 2: ragged batch (B % TB != 0) with several grid steps per core ->
    # exercises multi-tile accumulation, remainder masking, and the clamped
    # out-of-range tile on the second core split.
    s2 = jax.random.normal(k3, (20, 256), dtype=jnp.float32)
    t2 = jax.random.normal(k4, (20, 256), dtype=jnp.float32)
    loss2 = cosine_similarity_loss(s2, t2, max_tile_rows=8)
    jax.block_until_ready(loss2)
    assert jnp.allclose(loss2, _reference_loss(s2, t2), atol=1e-5, rtol=1e-5), (
        loss2, _reference_loss(s2, t2))

    # Case 3: bf16 inputs stay bf16 through the BlockSpec; f32 accumulation in-kernel.
    s3 = jax.random.normal(k5, (16, 256)).astype(jnp.bfloat16)
    t3 = jax.random.normal(k6, (16, 256)).astype(jnp.bfloat16)
    loss3 = cosine_similarity_loss(s3, t3)
    jax.block_until_ready(loss3)
    assert jnp.allclose(loss3, _reference_loss(s3, t3), atol=2e-3, rtol=2e-3), (
        loss3, _reference_loss(s3, t3))

    print("KERNEL_OK")
</pallas_src>

<mosaic_0001>
module attributes {stable_mosaic.version = 11 : i64} {
  func.func @_cosine_loss_kernel(%arg0: i32, %arg1: i32, %arg2: memref<8x128xf32, #tpu.memory_space<vmem>>, %arg3: memref<8x128xf32, #tpu.memory_space<vmem>>, %arg4: memref<1x8x128xf32, #tpu.memory_space<vmem>>, %arg5: memref<8x1xf32, #tpu.memory_space<vmem>>) attributes {dimension_semantics = [#tpu.dimension_semantics<parallel>, #tpu.dimension_semantics<arbitrary>], iteration_bounds = array<i64: 2, 1>, scalar_prefetch = 0 : i64, scratch_operands = 1 : i64, tpu.core_type = #tpu.core_type<tc>, window_params = [{transform_indices = @transform_0, window_bounds = array<i64: 8, 128>}, {transform_indices = @transform_1, window_bounds = array<i64: 8, 128>}, {transform_indices = @transform_2, window_bounds = array<i64: 1, 8, 128>}]} {
    %c0_i32 = arith.constant 0 : i32
    %0 = arith.cmpi eq, %arg1, %c0_i32 : i32
    %1 = arith.extui %0 : i1 to i32
    %c0_i32_0 = arith.constant 0 : i32
    %2 = arith.cmpi ne, %1, %c0_i32_0 : i32
    scf.if %2 {
      %cst_15 = arith.constant 0.000000e+00 : f32
      %36 = vector.broadcast %cst_15 : f32 to vector<8x1xf32>
      %c0_16 = arith.constant 0 : index
      %c0_17 = arith.constant 0 : index
      %37 = vector.load %arg5[%c0_16, %c0_17] : memref<8x1xf32, #tpu.memory_space<vmem>>, vector<8x1xf32>
      tpu.vector_store %arg5[%c0_16, %c0_17], %36 {strides = array<i32>} : memref<8x1xf32, #tpu.memory_space<vmem>>, vector<8x1xf32>,
    } else {
    }
    %c0 = arith.constant 0 : index
    %c0_1 = arith.constant 0 : index
    %3 = vector.load %arg2[%c0, %c0_1] : memref<8x128xf32, #tpu.memory_space<vmem>>, vector<8x128xf32>
    %c0_2 = arith.constant 0 : index
    %c0_3 = arith.constant 0 : index
    %4 = vector.load %arg3[%c0_2, %c0_3] : memref<8x128xf32, #tpu.memory_space<vmem>>, vector<8x128xf32>
    %5 = arith.mulf %3, %4 : vector<8x128xf32>
    %cst = arith.constant dense<0.000000e+00> : vector<8xf32>
    %6 = vector.multi_reduction <add>, %5, %cst [1] : vector<8x128xf32> to vector<8xf32>
    %7 = vector.shape_cast %6 : vector<8xf32> to vector<8x1xf32>
    %8 = arith.mulf %3, %3 : vector<8x128xf32>
    %cst_4 = arith.constant dense<0.000000e+00> : vector<8xf32>
    %9 = vector.multi_reduction <add>, %8, %cst_4 [1] : vector<8x128xf32> to vector<8xf32>
    %10 = vector.shape_cast %9 : vector<8xf32> to vector<8x1xf32>
    %11 = arith.mulf %4, %4 : vector<8x128xf32>
    %cst_5 = arith.constant dense<0.000000e+00> : vector<8xf32>
    %12 = vector.multi_reduction <add>, %11, %cst_5 [1] : vector<8x128xf32> to vector<8xf32>
    %13 = vector.shape_cast %12 : vector<8xf32> to vector<8x1xf32>
    %14 = math.sqrt %10 : vector<8x1xf32>
    %15 = math.sqrt %13 : vector<8x1xf32>
    %16 = arith.mulf %14, %15 : vector<8x1xf32>
    %cst_6 = arith.constant 9.99999993E-9 : f32
    %17 = vector.broadcast %cst_6 : f32 to vector<8x1xf32>
    %18 = arith.maximumf %16, %17 : vector<8x1xf32>
    %19 = arith.divf %7, %18 : vector<8x1xf32>
    %c1_i32 = arith.constant 1 : i32
    %20 = arith.muli %arg0, %c1_i32 : i32
    %21 = arith.addi %20, %arg1 : i32
    %c8_i32 = arith.constant 8 : i32
    %22 = arith.muli %21, %c8_i32 : i32
    %23 = tpu.iota {dimensions = array<i32: 0>} : vector<8x1xi32>
    %24 = vector.broadcast %22 : i32 to vector<8x1xi32>
    %25 = arith.addi %24, %23 : vector<8x1xi32>
    %c8_i32_7 = arith.constant 8 : i32
    %26 = vector.broadcast %c8_i32_7 : i32 to vector<8x1xi32>
    %27 = arith.cmpi slt, %25, %26 : vector<8x1xi32>
    %cst_8 = arith.constant 0.000000e+00 : f32
    %28 = vector.broadcast %cst_8 : f32 to vector<8x1xf32>
    %29 = arith.select %27, %19, %28 : vector<8x1xi1>, vector<8x1xf32>
    %c0_9 = arith.constant 0 : index
    %c0_10 = arith.constant 0 : index
    %30 = vector.load %arg5[%c0_9, %c0_10] : memref<8x1xf32, #tpu.memory_space<vmem>>, vector<8x1xf32>
    %31 = arith.addf %30, %29 : vector<8x1xf32>
    %c0_11 = arith.constant 0 : index
    %c0_12 = arith.constant 0 : index
    %32 = vector.load %arg5[%c0_11, %c0_12] : memref<8x1xf32, #tpu.memory_space<vmem>>, vector<8x1xf32>
    tpu.vector_store %arg5[%c0_11, %c0_12], %31 {strides = array<i32>} : memref<8x1xf32, #tpu.memory_space<vmem>>, vector<8x1xf32>,
    %c0_i32_13 = arith.constant 0 : i32
    %33 = arith.cmpi eq, %arg1, %c0_i32_13 : i32
    %34 = arith.extui %33 : i1 to i32
    %c0_i32_14 = arith.constant 0 : i32
    %35 = arith.cmpi ne, %34, %c0_i32_14 : i32
    scf.if %35 {
      %c0_15 = arith.constant 0 : index
      %c0_16 = arith.constant 0 : index
      %36 = vector.load %arg5[%c0_15, %c0_16] : memref<8x1xf32, #tpu.memory_space<vmem>>, vector<8x1xf32>
      %37 = vector.shape_cast %36 : vector<8x1xf32> to vector<1x8x1xf32>
      %cst_17 = arith.constant dense<0.000000e+00> : vector<1xf32>
      %38 = vector.multi_reduction <add>, %37, %cst_17 [1, 2] : vector<1x8x1xf32> to vector<1xf32>
      %39 = vector.shape_cast %38 : vector<1xf32> to vector<1x1x1xf32>
      %40 = vector.extract %39[0, 0, 0] : f32 from vector<1x1x1xf32>
      %41 = vector.broadcast %40 : f32 to vector<1x8x128xf32>
      %c0_18 = arith.constant 0 : index
      %c0_19 = arith.constant 0 : index
      %c0_20 = arith.constant 0 : index
      %42 = vector.load %arg4[%c0_18, %c0_19, %c0_20] : memref<1x8x128xf32, #tpu.memory_space<vmem>>, vector<1x8x128xf32>
      tpu.vector_store %arg4[%c0_18, %c0_19, %c0_20], %41 {strides = array<i32>} : memref<1x8x128xf32, #tpu.memory_space<vmem>>, vector<1x8x128xf32>,
    } else {
    }
    return
  }
  func.func @transform_0(%arg0: i32, %arg1: i32) -> (i32, i32) {
    %c1_i32 = arith.constant 1 : i32
    %0 = arith.muli %arg0, %c1_i32 : i32
    %1 = arith.addi %0, %arg1 : i32
    %c0_i32 = arith.constant 0 : i32
    %2 = arith.minsi %1, %c0_i32 : i32
    %c0_i32_0 = arith.constant 0 : i32
    %c0_i32_1 = arith.constant 0 : i32
    return %2, %c0_i32_0 : i32, i32
  }
  func.func @transform_1(%arg0: i32, %arg1: i32) -> (i32, i32) {
    %c1_i32 = arith.constant 1 : i32
    %0 = arith.muli %arg0, %c1_i32 : i32
    %1 = arith.addi %0, %arg1 : i32
    %c0_i32 = arith.constant 0 : i32
    %2 = arith.minsi %1, %c0_i32 : i32
    %c0_i32_0 = arith.constant 0 : i32
    %c0_i32_1 = arith.constant 0 : i32
    return %2, %c0_i32_0 : i32, i32
  }
  func.func @transform_2(%arg0: i32, %arg1: i32) -> (i32, i32, i32) {
    %c0_i32 = arith.constant 0 : i32
    %c0_i32_0 = arith.constant 0 : i32
    %c0_i32_1 = arith.constant 0 : i32
    return %arg0, %c0_i32, %c0_i32_0 : i32, i32, i32
  }
}

</mosaic_0001>

<llo_original>
// kernel: tpu_custom_call.1
$region0: #{tpu_custom_call.1}
  #allocation0 [shape = 'u32[]', space=smem, size = 0x4, offset = 0x4, fixed_abs, tag = 'smem constant byte address 0x4 - core index']
  #allocation1 [shape = 'u32[144,128]{1,0:T(1,128)}', space=vmem, size = 0x12000, scoped, tag = 'internal scratch']
  #allocation2 [shape = 'f32[8,1]{1,0:T(8,128)}', space=vmem, size = 0x1000, scoped, tag = 'scratch operand']
  %s0 = inlined_call_operand.hbm [shape: f32[8,128], index: 0, kind: input, shape index: {}]
  %s1 = inlined_call_operand.hbm [shape: f32[8,128], index: 1, kind: input, shape index: {}]
  %s2 = inlined_call_operand.hbm [shape: f32[2,8,128], index: 2, kind: output, shape index: {}]
  %s3 = sld [smem:[#allocation0]]
  $region57: #{tpu_custom_call.1} parent=0
    _
  %s5 = ssub.s32 1, %s3
  %s6 = scalar_select 0, %s5, %s3
  $region1: #{tpu_custom_call.1} parent=0
    #allocation3 [shape = 'u8[8192]{0}', space=vmem, size = 0x2000, scoped, tag = 'input window, operand 0']
    #allocation4 [shape = 's32[2]{0}', space=sflag, size = 0x8, scoped, tag = 'scoped memory for tpu_custom_call.1']
    #allocation5 [shape = 's32[2]{0}', space=sflag, size = 0x8, scoped, tag = 'scoped memory for tpu_custom_call.1']
    #allocation6 [shape = 'u8[8192]{0}', space=vmem, size = 0x2000, scoped, tag = 'input window, operand 1']
    #allocation7 [shape = 's32[2]{0}', space=sflag, size = 0x8, scoped, tag = 'scoped memory for tpu_custom_call.1']
    #allocation8 [shape = 'u8[8192]{0}', space=vmem, size = 0x2000, scoped, tag = 'output window, operand 0']
    %7 = vsyncpa [#allocation4], 0
    %s8 = scalar_lea.sflag [#allocation4], 1
    %9 = vsyncpa %s8, 0
    %10 = vsyncpa [#allocation7], 0
    %s11 = scalar_lea.sflag [#allocation7], 1
    %12 = vsyncpa %s11, 0
    %13 = vsyncpa [#allocation5], 0
    %s14 = scalar_lea.sflag [#allocation5], 1
    %15 = vsyncpa %s14, 0
    loop: start=0, step=1, limit=4
    $region2: #{tpu_custom_call.1} parent=1 // loop_pre_header
      _
    $region3: #{tpu_custom_call.1} parent=1 // loop_header
      %s17 = sphi 0, %s21
      %p18 = scmp.ge.s32.totalorder %s17, 4
      %s24 = sphi 0, %s36
      %s25 = sphi 0, %s32
      %s26 = sphi 0, %s24
      %s27 = sphi 0, %s25
      %s28 = sphi 0, %s26
      %s29 = sphi 0, %s27
      %s45 = sphi 0, %s47
      %s48 = sphi 0, %s45
      %s49 = sphi 0, %s48
      %s65 = sphi 0, %s49
      %s77 = sphi 0, %s79
      %s80 = sphi 0, %s77
      %s81 = sphi 0, %s80
      %s97 = sphi 0, %s81
      %s103 = sphi 0, %s105
      %s106 = sphi 0, %s103
      %s107 = sphi 0, %s106
      %s123 = sphi 0, %s107
    $region4: #{tpu_custom_call.1} parent=1 // loop_header_branch
      %20 = sbr.rel (%p18) target = $region8
    $region5: #{tpu_custom_call.1} parent=1 // loop_body
      %s22 = ssub.s32 %s17, 1
      %s23 = ssub.s32 %s17, 2
      %s30 = sadd.s32 1, %s25
      %p31 = scmp.ge.s32.totalorder %s30, 1
      %s32 = scalar_select %p31, 0, %s30
      %s33 = sadd.s32 1, %s24
      %s34 = scalar_select %p31, %s33, %s24
      %p35 = scmp.ge.s32.totalorder %s34, 2
      %s36 = scalar_select %p35, 0, %s34
      %s37 = sadd.s32 %s24, %s25
      %p38 = scmp.lt.s32.totalorder %s37, 0
      %s39 = scalar_select %p38, %s37, 0
      %s40 = sadd.s32 %s36, %s32
      %p41 = scmp.lt.s32.totalorder %s40, 0
      %s42 = scalar_select %p41, %s40, 0
      %s43 = ssub.s32 %s39, %s42
      %p44 = scmp.eq.s32.totalorder %s43, 0
      %s46 = sadd.s32 %s45, 1
      %s47 = scalar_select %p44, %s45, %s46
      %p50 = pneg %p44
      %p51 = scmp.eq.s32.totalorder %s17, 1
      %p52 = por %p50, %p51
      %p53 = scmp.ne.s32.totalorder %s45, %s48
      %p54 = scmp.eq.s32.totalorder %s17, 0
      %p55 = por %p53, %p54
      %p56 = scmp.ne.s32.totalorder %s45, %s48
      %p57 = scmp.eq.s32.totalorder %s22, 1
      %p58 = por %p56, %p57
      %p59 = scmp.ne.s32.totalorder %s48, %s49
      %p60 = scmp.eq.s32.totalorder %s22, 0
      %p61 = por %p59, %p60
      %p62 = scmp.ne.s32.totalorder %s48, %s49
      %p63 = scmp.eq.s32.totalorder %s23, 1
      %p64 = por %p62, %p63
      %p66 = scmp.ne.s32.totalorder %s49, %s65
      %p67 = scmp.eq.s32.totalorder %s23, 0
      %p68 = por %p66, %p67
      %s69 = sadd.s32 %s24, %s25
      %p70 = scmp.lt.s32.totalorder %s69, 0
      %s71 = scalar_select %p70, %s69, 0
      %s72 = sadd.s32 %s36, %s32
      %p73 = scmp.lt.s32.totalorder %s72, 0
      %s74 = scalar_select %p73, %s72, 0
      %s75 = ssub.s32 %s71, %s74
      %p76 = scmp.eq.s32.totalorder %s75, 0
      %s78 = sadd.s32 %s77, 1
      %s79 = scalar_select %p76, %s77, %s78
      %p82 = pneg %p76
      %p83 = scmp.eq.s32.totalorder %s17, 1
      %p84 = por %p82, %p83
      %p85 = scmp.ne.s32.totalorder %s77, %s80
      %p86 = scmp.eq.s32.totalorder %s17, 0
      %p87 = por %p85, %p86
      %p88 = scmp.ne.s32.totalorder %s77, %s80
      %p89 = scmp.eq.s32.totalorder %s22, 1
      %p90 = por %p88, %p89
      %p91 = scmp.ne.s32.totalorder %s80, %s81
      %p92 = scmp.eq.s32.totalorder %s22, 0
      %p93 = por %p91, %p92
      %p94 = scmp.ne.s32.totalorder %s80, %s81
      %p95 = scmp.eq.s32.totalorder %s23, 1
      %p96 = por %p94, %p95
      %p98 = scmp.ne.s32.totalorder %s81, %s97
      %p99 = scmp.eq.s32.totalorder %s23, 0
      %p100 = por %p98, %p99
      %s101 = ssub.s32 %s24, %s36
      %p102 = scmp.eq.s32.totalorder %s101, 0
      %s104 = sadd.s32 %s103, 1
      %s105 = scalar_select %p102, %s103, %s104
      %p108 = pneg %p102
      %p109 = scmp.eq.s32.totalorder %s17, 1
      %p110 = por %p108, %p109
      %p111 = scmp.ne.s32.totalorder %s103, %s106
      %p112 = scmp.eq.s32.totalorder %s17, 0
      %p113 = por %p111, %p112
      %p114 = scmp.ne.s32.totalorder %s103, %s106
      %p115 = scmp.eq.s32.totalorder %s22, 1
      %p116 = por %p114, %p115
      %p117 = scmp.ne.s32.totalorder %s106, %s107
      %p118 = scmp.eq.s32.totalorder %s22, 0
      %p119 = por %p117, %p118
      %p120 = scmp.ne.s32.totalorder %s106, %s107
      %p121 = scmp.eq.s32.totalorder %s23, 1
      %p122 = por %p120, %p121
      %p124 = scmp.ne.s32.totalorder %s107, %s123
      %p125 = scmp.eq.s32.totalorder %s23, 0
      %p126 = por %p124, %p125
      %p127 = scmp.le.s32.totalorder 1, %s17
      %p128 = scmp.lt.s32.totalorder %s17, 3
      %p129 = pnand %p127, %p128
      %p130 = pneg %p129
      // Predicated region
      $region9: #{tpu_custom_call.1} parent=5 // pred_check
        _
      $region10: #{tpu_custom_call.1} parent=5 // pred_check_branch
        %132 = sbr.rel (%p129) target = $region12
      $region11: #{tpu_custom_call.1} parent=5 // pred_region
        %s133 = ssub.s32 %s17, 1
      $region12: #{tpu_custom_call.1} parent=5 // pred_fallthru
        _
      %p134 = scmp.lt.s32.totalorder %s17, 2
      // Predicated region
      $region13: #{tpu_custom_call.1} parent=5 // pred_check
        %p135 = pneg %p134
      $region14: #{tpu_custom_call.1} parent=5 // pred_check_branch
        %137 = sbr.rel (%p135) target = $region16
      $region15: #{tpu_custom_call.1} parent=5 // pred_region
        // Predicated region
        $region17: #{tpu_custom_call.1} parent=15 // pred_check
          %p138 = pneg %p55
        $region18: #{tpu_custom_call.1} parent=15 // pred_check_branch
          %140 = sbr.rel (%p138) target = $region20
        $region19: #{tpu_custom_call.1} parent=15 // pred_region
          %s141 = sand.u32 %s45, 1
          %s142 = scalar_lea.sflag [#allocation4], %s141
          %s143 = sand.u32 %s45, 1
          %s144 = smul.addr %s143, 8
          %s145 = scalar_lea.vmem [#allocation3], %s144
          %s146 = sadd.s32 %s24, %s25
          %p147 = scmp.lt.s32.totalorder %s146, 0
          %s148 = scalar_select %p147, %s146, 0
          %s150 = ssub.s32 128, 128
          %151 = vsyncadd %s142, %s150
          %s152 = smul.addr %s148, 128
          %s153 = scalar_lea.hbm %s0, %s152
          %s155 = sshll.u32 %s145, 4
          %s156 = int_to_ptr.vmem [resolvable:$true] %s155
          %158 = dma.hbm_to_vmem [thread:$0]  %s153, 128, %s156, %s142
        $region20: #{tpu_custom_call.1} parent=15 // pred_fallthru
          _
        // Predicated region
        $region21: #{tpu_custom_call.1} parent=15 // pred_check
          %p159 = pneg %p87
        $region22: #{tpu_custom_call.1} parent=15 // pred_check_branch
          %161 = sbr.rel (%p159) target = $region24
        $region23: #{tpu_custom_call.1} parent=15 // pred_region
          %s162 = sand.u32 %s77, 1
          %s163 = scalar_lea.sflag [#allocation7], %s162
          %s164 = sand.u32 %s77, 1
          %s165 = smul.addr %s164, 8
          %s166 = scalar_lea.vmem [#allocation6], %s165
          %s167 = sadd.s32 %s24, %s25
          %p168 = scmp.lt.s32.totalorder %s167, 0
          %s169 = scalar_select %p168, %s167, 0
          %s171 = ssub.s32 128, 128
          %172 = vsyncadd %s163, %s171
          %s173 = smul.addr %s169, 128
          %s174 = scalar_lea.hbm %s1, %s173
          %s176 = sshll.u32 %s166, 4
          %s177 = int_to_ptr.vmem [resolvable:$true] %s176
          %179 = dma.hbm_to_vmem [thread:$0]  %s174, 128, %s177, %s163
        $region24: #{tpu_custom_call.1} parent=15 // pred_fallthru
          _
      $region16: #{tpu_custom_call.1} parent=5 // pred_fallthru
        _
      %p180 = scmp.le.s32.totalorder 1, %s17
      %p181 = scmp.lt.s32.totalorder %s17, 3
      %p182 = pnand %p180, %p181
      %p183 = pneg %p182
      // Predicated region
      $region25: #{tpu_custom_call.1} parent=5 // pred_check
        _
      $region26: #{tpu_custom_call.1} parent=5 // pred_check_branch
        %185 = sbr.rel (%p182) target = $region28
      $region27: #{tpu_custom_call.1} parent=5 // pred_region
        %s186 = ssub.s32 %s17, 1
        %s187 = sand.u32 %s48, 1
        %s188 = scalar_lea.sflag [#allocation4], %s187
        %s189 = sand.u32 %s48, 1
        %s190 = smul.addr %s189, 8
        %s191 = scalar_lea.vmem [#allocation3], %s190
        // Predicated region
        $region29: #{tpu_custom_call.1} parent=27 // pred_check
          %p192 = pneg %p61
        $region30: #{tpu_custom_call.1} parent=27 // pred_check_branch
          %194 = sbr.rel (%p192) target = $region32
        $region31: #{tpu_custom_call.1} parent=27 // pred_region
          %195 = dma.done %s188, 128
        $region32: #{tpu_custom_call.1} parent=27 // pred_fallthru
          _
        %s196 = sand.u32 %s80, 1
        %s197 = scalar_lea.sflag [#allocation7], %s196
        %s198 = sand.u32 %s80, 1
        %s199 = smul.addr %s198, 8
        %s200 = scalar_lea.vmem [#allocation6], %s199
        // Predicated region
        $region33: #{tpu_custom_call.1} parent=27 // pred_check
          %p201 = pneg %p93
        $region34: #{tpu_custom_call.1} parent=27 // pred_check_branch
          %203 = sbr.rel (%p201) target = $region36
        $region35: #{tpu_custom_call.1} parent=27 // pred_region
          %204 = dma.done %s197, 128
        $region36: #{tpu_custom_call.1} parent=27 // pred_fallthru
          _
        %s205 = sand.u32 %s48, 1
        %s206 = scalar_lea.sflag [#allocation4], %s205
        %s207 = sand.u32 %s48, 1
        %s208 = smul.addr %s207, 8
        %s209 = scalar_lea.vmem [#allocation3], %s208
        %p210 = pneg %p61
        %p211 = pneg %p58
        %s212 = sand.u32 %s80, 1
        %s213 = scalar_lea.sflag [#allocation7], %s212
        %s214 = sand.u32 %s80, 1
        %s215 = smul.addr %s214, 8
        %s216 = scalar_lea.vmem [#allocation6], %s215
        %p217 = pneg %p93
        %p218 = pneg %p90
        %p219 = pneg %p119
        %p220 = pneg %p116
        %s221 = sand.u32 %s106, 1
        %s222 = scalar_lea.sflag [#allocation5], %s221
        %s223 = sand.u32 %s106, 1
        %s224 = smul.addr %s223, 8
        %s225 = scalar_lea.vmem [#allocation8], %s224
        %s226 = sadd.s32 %s26, %s27
        %p227 = scmp.lt.s32.totalorder %s226, 0
        %s228 = scalar_select %p227, %s226, 0
        %s229 = sadd.s32 %s26, %s27
        %p230 = scmp.lt.s32.totalorder %s229, 0
        %s231 = scalar_select %p230, %s229, 0
        %p232 = scmp.eq.s32.totalorder %s27, 0
        // Predicated region
        $region37: #{tpu_custom_call.1} parent=27 // pred_check
          %p233 = pneg %p232
        $region38: #{tpu_custom_call.1} parent=27 // pred_check_branch
          %235 = sbr.rel (%p233) target = $region40
        $region39: #{tpu_custom_call.1} parent=27 // pred_region
          %vm236 = vcmask 7168
          %237 = vst.msk [vmem:[#allocation2] sm:$0xff] %vm236, 0.0
        $region40: #{tpu_custom_call.1} parent=27 // pred_fallthru
          _
        %v238 = vld [vmem:[%s191] sm:$0xff]
        %v239 = vld [vmem:[%s200] sm:$0xff]
        %v240 = vmul.f32 %v238, %v239
        %241 = vadd.xlane.f32.xlu0 %v240
        %v242 = vpop.xlane.xlu0 %241
        %v243 = vmul.f32 %v238, %v238
        %244 = vadd.xlane.f32.xlu0 %v243
        %v245 = vpop.xlane.xlu0 %244
        %v246 = vmul.f32 %v239, %v239
        %247 = vadd.xlane.f32.xlu0 %v246
        %v248 = vpop.xlane.xlu0 %247
        %v249 = vrsqrt.pop %v245
        %v250 = vmul.f32 %v245, %v249
        %vm251 = vcmp.eq.f32.partialorder %v245, inf
        %v252 = vsel %vm251, %v245, %v250
        %vm253 = vcmp.eq.f32.partialorder %v245, 0.0
        %v254 = vand.u32 %v245, 2147483648
        %v255 = vsel %vm253, %v254, %v252
        %v256 = vrsqrt.pop %v248
        %v257 = vmul.f32 %v248, %v256
        %vm258 = vcmp.eq.f32.partialorder %v248, inf
        %v259 = vsel %vm258, %v248, %v257
        %vm260 = vcmp.eq.f32.partialorder %v248, 0.0
        %v261 = vand.u32 %v248, 2147483648
        %v262 = vsel %vm260, %v261, %v259
        %v263 = vmul.f32 %v255, %v262
        %v264 = vmax.f32 %v263, 1e-08
        %v265 = vrcp.pop %v264
        %v266 = vmul.f32 %v242, %v265
        %s267 = sadd.s32 %s26, %s27
        %s268 = smul.u32 %s267, 8
        %v269 = vlaneseq
        %v270 = vshrl.u32 %v269, 7
        %v271 = vstv %s268
        %v272 = vadd.s32 %v271, %v270
        %vm273 = vcmp.lt.s32.totalorder %v272, 8
        %v274 = vsel %vm273, %v266, 0.0
        %v275 = vld [vmem:[#allocation2] sm:$0xff]
        %v276 = vadd.f32 %v275, %v274
        %vm277 = vcmask 7168
        %278 = vst.msk [vmem:[#allocation2] sm:$0xff] %vm277, %v276
        // Predicated region
        $region41: #{tpu_custom_call.1} parent=27 // pred_check
          %p279 = pneg %p232
        $region42: #{tpu_custom_call.1} parent=27 // pred_check_branch
          %281 = sbr.rel (%p279) target = $region44
        $region43: #{tpu_custom_call.1} parent=27 // pred_region
          %v282 = vld [vmem:[#allocation2] sm:$0xff]
          %v283 = vsel %vm277, %v282, 0.0
          %284 = vadd.xlane.f32.xlu0 %v283
          %v285 = vpop.xlane.xlu0 %284
          %v286 = vrot.slane %v285, 4
          %v287 = vadd.f32 %v285, %v286
          %v288 = vrot.slane %v287, 2
          %v289 = vadd.f32 %v287, %v288
          %v290 = vrot.slane %v289, 1
          %v291 = vadd.f32 %v289, %v290
          %s292 = vtos %v291
          %v293 = vstv %s292
          %294 = vst [vmem:[%s225] sm:$0xff] %v293
        $region44: #{tpu_custom_call.1} parent=27 // pred_fallthru
          _
        %s295 = sand.u32 %s106, 1
        %s296 = scalar_lea.sflag [#allocation5], %s295
        %s297 = sand.u32 %s106, 1
        %s298 = smul.addr %s297, 8
        %s299 = scalar_lea.vmem [#allocation8], %s298
        // Predicated region
        $region45: #{tpu_custom_call.1} parent=27 // pred_check
          %p300 = pneg %p116
        $region46: #{tpu_custom_call.1} parent=27 // pred_check_branch
          %302 = sbr.rel (%p300) target = $region48
        $region47: #{tpu_custom_call.1} parent=27 // pred_region
          %s304 = ssub.s32 128, 128
          %305 = vsyncadd %s296, %s304
          %s306 = smul.addr %s26, 128
          %s307 = scalar_lea.hbm %s2, %s306
          %s309 = sshll.u32 %s299, 4
          %s310 = int_to_ptr.vmem [resolvable:$true] %s309
          %312 = dma.vmem_to_hbm [thread:$0]  %s310, 128, %s307, %s296
        $region48: #{tpu_custom_call.1} parent=27 // pred_fallthru
          _
      $region28: #{tpu_custom_call.1} parent=5 // pred_fallthru
        _
      %p313 = scmp.le.s32.totalorder 2, %s17
      // Predicated region
      $region49: #{tpu_custom_call.1} parent=5 // pred_check
        %p314 = pneg %p313
      $region50: #{tpu_custom_call.1} parent=5 // pred_check_branch
        %316 = sbr.rel (%p314) target = $region52
      $region51: #{tpu_custom_call.1} parent=5 // pred_region
        %s317 = ssub.s32 %s17, 2
        // Predicated region
        $region53: #{tpu_custom_call.1} parent=51 // pred_check
          %p318 = pneg %p122
        $region54: #{tpu_custom_call.1} parent=51 // pred_check_branch
          %320 = sbr.rel (%p318) target = $region56
        $region55: #{tpu_custom_call.1} parent=51 // pred_region
          %s321 = sand.u32 %s107, 1
          %s322 = scalar_lea.sflag [#allocation5], %s321
          %s323 = sand.u32 %s107, 1
          %s324 = smul.addr %s323, 8
          %s325 = scalar_lea.vmem [#allocation8], %s324
          %326 = dma.done %s322, 128
        $region56: #{tpu_custom_call.1} parent=51 // pred_fallthru
          _
      $region52: #{tpu_custom_call.1} parent=5 // pred_fallthru
        _
    $region6: #{tpu_custom_call.1} parent=1 // loop_footer
      %s21 = sadd.s32 1, %s17
    $region7: #{tpu_custom_call.1} parent=1 // loop_footer_branch
      %16 = sbr.rel target = $region3
    $region8: #{tpu_custom_call.1} parent=1 // loop_exit
      _
    %327 = vsyncpa [#allocation4], 1
    %s328 = scalar_lea.sflag [#allocation4], 1
    %329 = vsyncpa %s328, 1
    %330 = vsyncpa [#allocation7], 1
    %s331 = scalar_lea.sflag [#allocation7], 1
    %332 = vsyncpa %s331, 1
    %333 = vsyncpa [#allocation5], 1
    %s334 = scalar_lea.sflag [#allocation5], 1
    %335 = vsyncpa %s334, 1

</llo_original>
